<compile_context>
chip_gen: v6e
topology: v6e:2x2x1
jax: 0.10.0
libtpu: 0.0.40
codegen_flags: <defaults>
</compile_context>

<pallas_src>
import functools

import jax
import jax.numpy as jnp
from jax.experimental import pallas as pl
from jax.experimental.pallas import tpu as pltpu


def _rnn_fc_kernel(
    # inputs
    obs_ref, hin_ref,
    w1_ref, b1_ref,
    wi_ref, bi_ref,        # fused GRU input-hidden weights/bias  (H, 3*GP), (1, 3*GP)
    wh_ref, bh_ref,        # fused GRU hidden-hidden weights/bias (H, 3*GP), (1, 3*GP)
    wout_ref, bout_ref,    # fused [fc2 | ec1] weights/bias       (H, 2*OP), (1, 2*OP)
    we2_ref, be2_ref,      # ec2                                  (EH, A), (1, A)
    # output: lane-dense padded slab [q | h | x | 0-pad]  (TM, OUT_PAD)
    out_ref,
    *, H, A, EH, GP, OP,
):
    mm_dtype = w1_ref.dtype          # f32 or bf16 matmul-operand dtype

    obs = obs_ref[...]
    h_in = hin_ref[...]              # stays f32: gating elementwise math in f32

    # fc1 + ReLU
    x1 = jnp.dot(obs.astype(mm_dtype), w1_ref[...],
                 preferred_element_type=jnp.float32) + b1_ref[...]
    x1 = jnp.maximum(x1, 0.0)

    # Fused GRUCell (PyTorch semantics), gate columns at 128-lane pitch GP:
    #   r = sigmoid(W_ir x + b_ir + W_hr h + b_hr)
    #   z = sigmoid(W_iz x + b_iz + W_hz h + b_hz)
    #   n = tanh(W_in x + b_in + r * (W_hn h + b_hn))
    #   h' = (1 - z) * n + z * h
    # (b_ir+b_hr and b_iz+b_hz are pre-combined into b_i; b_h carries only b_hn,
    #  which must stay inside r*(...).)
    gi = jnp.dot(x1.astype(mm_dtype), wi_ref[...],
                 preferred_element_type=jnp.float32) + bi_ref[...]
    gh = jnp.dot(h_in.astype(mm_dtype), wh_ref[...],
                 preferred_element_type=jnp.float32) + bh_ref[...]

    r = jax.nn.sigmoid(gi[:, 0:H] + gh[:, 0:H])
    z = jax.nn.sigmoid(gi[:, GP:GP + H] + gh[:, GP:GP + H])
    n = jnp.tanh(gi[:, 2 * GP:2 * GP + H] + r * gh[:, 2 * GP:2 * GP + H])
    h_new = (1.0 - z) * n + z * h_in

    # Fused fc2 + ec1 on h_new; the q/e split lands on a lane-128 boundary.
    qe = jnp.dot(h_new.astype(mm_dtype), wout_ref[...],
                 preferred_element_type=jnp.float32) + bout_ref[...]
    q = qe[:, 0:A]
    e = qe[:, OP:OP + EH]
    e = jnp.where(e > 0, e, 0.01 * e)          # LeakyReLU(0.01)
    x_out = jnp.dot(e.astype(mm_dtype), we2_ref[...],
                    preferred_element_type=jnp.float32) + be2_ref[...]

    # Lane-dense 128-wide output slab: zero the pad lanes once, then direct
    # slice stores (no concatenate rotates / extra materialization).
    out_ref[...] = jnp.zeros_like(out_ref)
    out_ref[:, 0:A] = q.astype(out_ref.dtype)
    out_ref[:, A:A + H] = h_new.astype(out_ref.dtype)
    out_ref[:, A + H:A + H + A] = x_out.astype(out_ref.dtype)


def pack_params(params, H, matmul_dtype=jnp.float32):
    """Pack per-gate / per-layer params into the fused, 128-lane-aligned layout.

    Host-side, done once. Weights are cast to `matmul_dtype` (bf16 recommended on
    v6e/v7x); biases stay f32 (they are added to the f32 accumulator).
    """
    A = params["w2"].shape[1]
    EH = params["we1"].shape[1]
    GP = pl.cdiv(H, 128) * 128               # lane pitch per fused GRU gate block
    OP = pl.cdiv(max(A, EH), 128) * 128      # lane pitch for the [fc2 | ec1] blocks

    def pad_to(x, n):
        return jnp.pad(x, ((0, 0), (0, n - x.shape[1])))

    zeros_gp = jnp.zeros((1, GP), jnp.float32)
    w_i = jnp.concatenate([pad_to(params["w_ir"], GP),
                           pad_to(params["w_iz"], GP),
                           pad_to(params["w_in"], GP)], axis=1)
    w_h = jnp.concatenate([pad_to(params["w_hr"], GP),
                           pad_to(params["w_hz"], GP),
                           pad_to(params["w_hn"], GP)], axis=1)
    b_i = jnp.concatenate([pad_to(params["b_ir"] + params["b_hr"], GP),
                           pad_to(params["b_iz"] + params["b_hz"], GP),
                           pad_to(params["b_in"], GP)], axis=1)
    b_h = jnp.concatenate([zeros_gp, zeros_gp, pad_to(params["b_hn"], GP)], axis=1)
    w_out = jnp.concatenate([pad_to(params["w2"], OP),
                             pad_to(params["we1"], OP)], axis=1)
    b_out = jnp.concatenate([pad_to(params["b2"], OP),
                             pad_to(params["be1"], OP)], axis=1)

    wd = matmul_dtype
    return {
        "w1": params["w1"].astype(wd), "b1": params["b1"],
        "w_i": w_i.astype(wd), "b_i": b_i,
        "w_h": w_h.astype(wd), "b_h": b_h,
        "w_out": w_out.astype(wd), "b_out": b_out,
        "we2": params["we2"].astype(wd), "be2": params["be2"],
    }


def rnn_fc_forward(obs, hidden_state, packed, rnn_hidden_dim):
    """obs: [B, input_shape]; hidden_state: any shape reshapable to [B, H].

    Returns (q, h, x) just like the PyTorch module's forward.
    """
    B, IN = obs.shape
    H = rnn_hidden_dim
    EH, A = packed["we2"].shape
    GP = packed["w_i"].shape[1] // 3         # gate lane pitch (static from shapes)
    OP = packed["w_out"].shape[1] // 2       # fc2/ec1 lane pitch
    OUT_W = A + H + A
    OUT_PAD = pl.cdiv(OUT_W, 128) * 128      # lane-dense output width

    h_in = hidden_state.reshape(-1, H)
    if h_in.shape[0] != B:
        raise ValueError(
            f"hidden_state reshapes to {h_in.shape[0]} rows, expected batch {B}")

    # Batch tiling:
    #  * Small batches: one full-size tile (TM == B, full-dim block).
    #  * Large batches: big tiles (per-grid-step overhead ~0.35 us dominates this
    #    tiny kernel) but at least 2 grid steps so both v7x TensorCores get work.
    #    TM rounds to a sublane (8-row) multiple; the last tile may be ragged and
    #    Pallas clips the partial block, so any B is accepted.
    # TODO(synk): on v7x, try dimension_semantics=(pltpu.CORE_PARALLEL,) (or an
    # explicit core_map split) for guaranteed 2-TC sharding of the batch axis.
    if B <= 512:
        TM = B
    else:
        TM = min(1024, pl.cdiv(B, 2))
        TM = pl.cdiv(TM, 8) * 8
    grid = (pl.cdiv(B, TM),)

    def row_spec(feat):
        return pl.BlockSpec((TM, feat), lambda i: (i, 0))

    def const_spec(arr):
        # Full-array block with a constant index_map: weights/biases stay
        # resident in VMEM across batch tiles.
        return pl.BlockSpec(arr.shape, lambda i: (0, 0))

    inputs = (
        obs, h_in,
        packed["w1"], packed["b1"],
        packed["w_i"], packed["b_i"],
        packed["w_h"], packed["b_h"],
        packed["w_out"], packed["b_out"],
        packed["we2"], packed["be2"],
    )
    in_specs = [row_spec(IN), row_spec(H)] + [const_spec(a) for a in inputs[2:]]

    out = pl.pallas_call(
        functools.partial(_rnn_fc_kernel, H=H, A=A, EH=EH, GP=GP, OP=OP),
        out_shape=jax.ShapeDtypeStruct((B, OUT_PAD), jnp.float32),
        grid=grid,
        in_specs=in_specs,
        out_specs=row_spec(OUT_PAD),
        compiler_params=pltpu.CompilerParams(
            dimension_semantics=("parallel",),
            # Big activation tiles need more than v5e's 16 MiB default scoped
            # VMEM; 40 MiB is ample for TM=1024 f32 and still well within v7x's
            # 64 MiB physical VMEM.
            vmem_limit_bytes=40 * 1024 * 1024,
        ),
    )(*inputs)

    q = out[:, 0:A]
    h = out[:, A:A + H]
    x = out[:, A + H:A + H + A]
    return q, h, x


def init_params(key, input_shape, rnn_hidden_dim, n_actions, hidden=32):
    """Deterministic synthetic init. Weights stored as [in, out]."""
    H, A, EH = rnn_hidden_dim, n_actions, hidden
    keys = jax.random.split(key, 12)

    def w(k, shape, scale=0.1):
        return (scale * jax.random.normal(k, shape)).astype(jnp.float32)

    return {
        "w1": w(keys[0], (input_shape, H)),
        "b1": w(keys[1], (1, H)),
        # GRU input-hidden gate weights (r, z, n)
        "w_ir": w(keys[2], (H, H)),
        "w_iz": w(keys[3], (H, H)),
        "w_in": w(keys[4], (H, H)),
        # GRU hidden-hidden gate weights (r, z, n)
        "w_hr": w(keys[5], (H, H)),
        "w_hz": w(keys[6], (H, H)),
        "w_hn": w(keys[7], (H, H)),
        # GRU biases (zero, matching inital_all_weights convention)
        "b_ir": jnp.zeros((1, H), jnp.float32),
        "b_iz": jnp.zeros((1, H), jnp.float32),
        "b_in": jnp.zeros((1, H), jnp.float32),
        "b_hr": jnp.zeros((1, H), jnp.float32),
        "b_hz": jnp.zeros((1, H), jnp.float32),
        "b_hn": jnp.zeros((1, H), jnp.float32),
        "w2": w(keys[8], (H, A)),
        "b2": w(keys[9], (1, A)),
        "we1": w(keys[10], (H, EH)),
        "be1": jnp.zeros((1, EH), jnp.float32),
        "we2": w(keys[11], (EH, A)),
        "be2": jnp.zeros((1, A), jnp.float32),
    }


def _reference_forward(obs, hidden_state, params, H):
    """Pure-JAX reference (mirrors the PyTorch forward, unfused)."""
    h_in = hidden_state.reshape(-1, H)
    x1 = jnp.maximum(obs @ params["w1"] + params["b1"], 0.0)
    i_r = x1 @ params["w_ir"] + params["b_ir"]
    i_z = x1 @ params["w_iz"] + params["b_iz"]
    i_n = x1 @ params["w_in"] + params["b_in"]
    h_r = h_in @ params["w_hr"] + params["b_hr"]
    h_z = h_in @ params["w_hz"] + params["b_hz"]
    h_n = h_in @ params["w_hn"] + params["b_hn"]
    r = jax.nn.sigmoid(i_r + h_r)
    z = jax.nn.sigmoid(i_z + h_z)
    n = jnp.tanh(i_n + r * h_n)
    h = (1.0 - z) * n + z * h_in
    q = h @ params["w2"] + params["b2"]
    e = h @ params["we1"] + params["be1"]
    e = jnp.where(e > 0, e, 0.01 * e)
    x = e @ params["we2"] + params["be2"]
    return q, h, x


if __name__ == "__main__":
    # Small shapes consistent with the module's forward.
    B = 8            # batch (e.g. n_agents * episodes)
    INPUT_SHAPE = 16
    RNN_HIDDEN = 32  # args.rnn_hidden_dim
    N_ACTIONS = 8    # args.n_actions
    HIDDEN = 32      # ec1 hidden

    key = jax.random.PRNGKey(0)
    k_obs, k_h, k_p, k_obs2, k_h2 = jax.random.split(key, 5)
    obs = jax.random.normal(k_obs, (B, INPUT_SHAPE), dtype=jnp.float32)
    hidden_state = jax.random.normal(k_h, (B, RNN_HIDDEN), dtype=jnp.float32)
    params = init_params(k_p, INPUT_SHAPE, RNN_HIDDEN, N_ACTIONS, HIDDEN)

    fwd = jax.jit(functools.partial(rnn_fc_forward, rnn_hidden_dim=RNN_HIDDEN))
    q_ref, h_ref, x_ref = _reference_forward(obs, hidden_state, params, RNN_HIDDEN)

    # 1) f32 matmul path: exact-semantics check (tight tolerance).
    packed_f32 = pack_params(params, RNN_HIDDEN, matmul_dtype=jnp.float32)
    q, h, x = fwd(obs, hidden_state, packed_f32)
    jax.block_until_ready((q, h, x))
    assert jnp.allclose(q, q_ref, atol=1e-5), "q mismatch (f32)"
    assert jnp.allclose(h, h_ref, atol=1e-5), "h mismatch (f32)"
    assert jnp.allclose(x, x_ref, atol=1e-5), "x mismatch (f32)"

    # 2) bf16 matmul operands (f32 accumulation, f32 elementwise gating):
    #    preferred perf configuration on v6e/v7x; looser tolerance.
    packed_bf16 = pack_params(params, RNN_HIDDEN, matmul_dtype=jnp.bfloat16)
    qb, hb, xb = fwd(obs, hidden_state, packed_bf16)
    jax.block_until_ready((qb, hb, xb))
    assert jnp.allclose(qb, q_ref, atol=3e-2), "q mismatch (bf16)"
    assert jnp.allclose(hb, h_ref, atol=3e-2), "h mismatch (bf16)"
    assert jnp.allclose(xb, x_ref, atol=3e-2), "x mismatch (bf16)"

    # 3) multi-tile + ragged-last-tile path (grid > 1, B not a multiple of TM).
    B2 = 600
    obs2 = jax.random.normal(k_obs2, (B2, INPUT_SHAPE), dtype=jnp.float32)
    hidden2 = jax.random.normal(k_h2, (B2, RNN_HIDDEN), dtype=jnp.float32)
    q2, h2, x2 = fwd(obs2, hidden2, packed_f32)
    jax.block_until_ready((q2, h2, x2))
    q2_ref, h2_ref, x2_ref = _reference_forward(obs2, hidden2, params, RNN_HIDDEN)
    assert jnp.allclose(q2, q2_ref, atol=1e-5), "q mismatch (ragged multi-tile)"
    assert jnp.allclose(h2, h2_ref, atol=1e-5), "h mismatch (ragged multi-tile)"
    assert jnp.allclose(x2, x2_ref, atol=1e-5), "x mismatch (ragged multi-tile)"

    # TODO(synk): if this cell is driven over a time sequence, fold the time loop
    # into the kernel (trailing "arbitrary" T grid axis, VMEM-resident hidden
    # state carried across steps, input_output_aliases for the final h writeback)
    # so the weight DMAs and per-step launch cost amortize over the sequence.

    print("KERNEL_OK")
</pallas_src>

<mosaic_0001>
module attributes {stable_mosaic.version = 11 : i64} {
  func.func @_rnn_fc_kernel(%arg0: i32, %arg1: memref<8x16xf32, #tpu.memory_space<vmem>>, %arg2: memref<8x32xf32, #tpu.memory_space<vmem>>, %arg3: memref<16x32xf32, #tpu.memory_space<vmem>>, %arg4: memref<1x32xf32, #tpu.memory_space<vmem>>, %arg5: memref<32x384xf32, #tpu.memory_space<vmem>>, %arg6: memref<1x384xf32, #tpu.memory_space<vmem>>, %arg7: memref<32x384xf32, #tpu.memory_space<vmem>>, %arg8: memref<1x384xf32, #tpu.memory_space<vmem>>, %arg9: memref<32x256xf32, #tpu.memory_space<vmem>>, %arg10: memref<1x256xf32, #tpu.memory_space<vmem>>, %arg11: memref<32x8xf32, #tpu.memory_space<vmem>>, %arg12: memref<1x8xf32, #tpu.memory_space<vmem>>, %arg13: memref<8x128xf32, #tpu.memory_space<vmem>>) attributes {dimension_semantics = [#tpu.dimension_semantics<parallel>], iteration_bounds = array<i64: 1>, scalar_prefetch = 0 : i64, scratch_operands = 0 : i64, tpu.core_type = #tpu.core_type<tc>, window_params = [{transform_indices = @transform_0, window_bounds = array<i64: 8, 16>}, {transform_indices = @transform_1, window_bounds = array<i64: 8, 32>}, {pipeline_mode = #tpu.pipeline_mode<synchronous>, transform_indices = @transform_2, window_bounds = array<i64: 16, 32>}, {pipeline_mode = #tpu.pipeline_mode<synchronous>, transform_indices = @transform_3, window_bounds = array<i64: 1, 32>}, {pipeline_mode = #tpu.pipeline_mode<synchronous>, transform_indices = @transform_4, window_bounds = array<i64: 32, 384>}, {pipeline_mode = #tpu.pipeline_mode<synchronous>, transform_indices = @transform_5, window_bounds = array<i64: 1, 384>}, {pipeline_mode = #tpu.pipeline_mode<synchronous>, transform_indices = @transform_6, window_bounds = array<i64: 32, 384>}, {pipeline_mode = #tpu.pipeline_mode<synchronous>, transform_indices = @transform_7, window_bounds = array<i64: 1, 384>}, {pipeline_mode = #tpu.pipeline_mode<synchronous>, transform_indices = @transform_8, window_bounds = array<i64: 32, 256>}, {pipeline_mode = #tpu.pipeline_mode<synchronous>, transform_indices = @transform_9, window_bounds = array<i64: 1, 256>}, {pipeline_mode = #tpu.pipeline_mode<synchronous>, transform_indices = @transform_10, window_bounds = array<i64: 32, 8>}, {pipeline_mode = #tpu.pipeline_mode<synchronous>, transform_indices = @transform_11, window_bounds = array<i64: 1, 8>}, {transform_indices = @transform_12, window_bounds = array<i64: 8, 128>}]} {
    %c0 = arith.constant 0 : index
    %c0_0 = arith.constant 0 : index
    %0 = vector.load %arg1[%c0, %c0_0] : memref<8x16xf32, #tpu.memory_space<vmem>>, vector<8x16xf32>
    %c0_1 = arith.constant 0 : index
    %c0_2 = arith.constant 0 : index
    %1 = vector.load %arg2[%c0_1, %c0_2] : memref<8x32xf32, #tpu.memory_space<vmem>>, vector<8x32xf32>
    %c0_3 = arith.constant 0 : index
    %c0_4 = arith.constant 0 : index
    %2 = vector.load %arg3[%c0_3, %c0_4] : memref<16x32xf32, #tpu.memory_space<vmem>>, vector<16x32xf32>
    %cst = arith.constant dense<0.000000e+00> : vector<8x32xf32>
    %3 = tpu.matmul %0, %2, %cst {dimension_numbers = #tpu.dot_dimension_numbers<[1], [0], [0], [1], [0, 0, 1, 1], [], []>} : vector<8x16xf32>, vector<16x32xf32>, vector<8x32xf32> -> vector<8x32xf32>
    %c0_5 = arith.constant 0 : index
    %c0_6 = arith.constant 0 : index
    %4 = vector.load %arg4[%c0_5, %c0_6] : memref<1x32xf32, #tpu.memory_space<vmem>>, vector<1x32xf32>
    %5 = vector.broadcast %4 : vector<1x32xf32> to vector<8x32xf32>
    %6 = arith.addf %3, %5 : vector<8x32xf32>
    %cst_7 = arith.constant 0.000000e+00 : f32
    %7 = vector.broadcast %cst_7 : f32 to vector<8x32xf32>
    %8 = arith.maximumf %6, %7 : vector<8x32xf32>
    %c0_8 = arith.constant 0 : index
    %c0_9 = arith.constant 0 : index
    %9 = vector.load %arg5[%c0_8, %c0_9] : memref<32x384xf32, #tpu.memory_space<vmem>>, vector<32x384xf32>
    %cst_10 = arith.constant dense<0.000000e+00> : vector<8x384xf32>
    %10 = tpu.matmul %8, %9, %cst_10 {dimension_numbers = #tpu.dot_dimension_numbers<[1], [0], [0], [1], [0, 0, 1, 1], [], []>} : vector<8x32xf32>, vector<32x384xf32>, vector<8x384xf32> -> vector<8x384xf32>
    %c0_11 = arith.constant 0 : index
    %c0_12 = arith.constant 0 : index
    %11 = vector.load %arg6[%c0_11, %c0_12] : memref<1x384xf32, #tpu.memory_space<vmem>>, vector<1x384xf32>
    %12 = vector.broadcast %11 : vector<1x384xf32> to vector<8x384xf32>
    %13 = arith.addf %10, %12 : vector<8x384xf32>
    %c0_13 = arith.constant 0 : index
    %c0_14 = arith.constant 0 : index
    %14 = vector.load %arg7[%c0_13, %c0_14] : memref<32x384xf32, #tpu.memory_space<vmem>>, vector<32x384xf32>
    %cst_15 = arith.constant dense<0.000000e+00> : vector<8x384xf32>
    %15 = tpu.matmul %1, %14, %cst_15 {dimension_numbers = #tpu.dot_dimension_numbers<[1], [0], [0], [1], [0, 0, 1, 1], [], []>} : vector<8x32xf32>, vector<32x384xf32>, vector<8x384xf32> -> vector<8x384xf32>
    %c0_16 = arith.constant 0 : index
    %c0_17 = arith.constant 0 : index
    %16 = vector.load %arg8[%c0_16, %c0_17] : memref<1x384xf32, #tpu.memory_space<vmem>>, vector<1x384xf32>
    %17 = vector.broadcast %16 : vector<1x384xf32> to vector<8x384xf32>
    %18 = arith.addf %15, %17 : vector<8x384xf32>
    %19 = vector.extract_strided_slice %13 {offsets = [0, 0], sizes = [8, 32], strides = [1, 1]} : vector<8x384xf32> to vector<8x32xf32>
    %20 = vector.extract_strided_slice %18 {offsets = [0, 0], sizes = [8, 32], strides = [1, 1]} : vector<8x384xf32> to vector<8x32xf32>
    %21 = arith.addf %19, %20 : vector<8x32xf32>
    %22 = arith.negf %21 : vector<8x32xf32>
    %23 = math.exp %22 : vector<8x32xf32>
    %cst_18 = arith.constant 1.000000e+00 : f32
    %24 = vector.broadcast %cst_18 : f32 to vector<8x32xf32>
    %25 = arith.addf %24, %23 : vector<8x32xf32>
    %26 = arith.divf %24, %25 : vector<8x32xf32>
    %27 = vector.extract_strided_slice %13 {offsets = [0, 128], sizes = [8, 32], strides = [1, 1]} : vector<8x384xf32> to vector<8x32xf32>
    %28 = vector.extract_strided_slice %18 {offsets = [0, 128], sizes = [8, 32], strides = [1, 1]} : vector<8x384xf32> to vector<8x32xf32>
    %29 = arith.addf %27, %28 : vector<8x32xf32>
    %30 = arith.negf %29 : vector<8x32xf32>
    %31 = math.exp %30 : vector<8x32xf32>
    %cst_19 = arith.constant 1.000000e+00 : f32
    %32 = vector.broadcast %cst_19 : f32 to vector<8x32xf32>
    %33 = arith.addf %32, %31 : vector<8x32xf32>
    %34 = arith.divf %32, %33 : vector<8x32xf32>
    %35 = vector.extract_strided_slice %13 {offsets = [0, 256], sizes = [8, 32], strides = [1, 1]} : vector<8x384xf32> to vector<8x32xf32>
    %36 = vector.extract_strided_slice %18 {offsets = [0, 256], sizes = [8, 32], strides = [1, 1]} : vector<8x384xf32> to vector<8x32xf32>
    %37 = arith.mulf %26, %36 : vector<8x32xf32>
    %38 = arith.addf %35, %37 : vector<8x32xf32>
    %39 = math.tanh %38 : vector<8x32xf32>
    %cst_20 = arith.constant 1.000000e+00 : f32
    %40 = vector.broadcast %cst_20 : f32 to vector<8x32xf32>
    %41 = arith.subf %40, %34 : vector<8x32xf32>
    %42 = arith.mulf %41, %39 : vector<8x32xf32>
    %43 = arith.mulf %34, %1 : vector<8x32xf32>
    %44 = arith.addf %42, %43 : vector<8x32xf32>
    %c0_21 = arith.constant 0 : index
    %c0_22 = arith.constant 0 : index
    %45 = vector.load %arg9[%c0_21, %c0_22] : memref<32x256xf32, #tpu.memory_space<vmem>>, vector<32x256xf32>
    %cst_23 = arith.constant dense<0.000000e+00> : vector<8x256xf32>
    %46 = tpu.matmul %44, %45, %cst_23 {dimension_numbers = #tpu.dot_dimension_numbers<[1], [0], [0], [1], [0, 0, 1, 1], [], []>} : vector<8x32xf32>, vector<32x256xf32>, vector<8x256xf32> -> vector<8x256xf32>
    %c0_24 = arith.constant 0 : index
    %c0_25 = arith.constant 0 : index
    %47 = vector.load %arg10[%c0_24, %c0_25] : memref<1x256xf32, #tpu.memory_space<vmem>>, vector<1x256xf32>
    %48 = vector.broadcast %47 : vector<1x256xf32> to vector<8x256xf32>
    %49 = arith.addf %46, %48 : vector<8x256xf32>
    %50 = vector.extract_strided_slice %49 {offsets = [0, 0], sizes = [8, 8], strides = [1, 1]} : vector<8x256xf32> to vector<8x8xf32>
    %51 = vector.extract_strided_slice %49 {offsets = [0, 128], sizes = [8, 32], strides = [1, 1]} : vector<8x256xf32> to vector<8x32xf32>
    %cst_26 = arith.constant 0.000000e+00 : f32
    %52 = vector.broadcast %cst_26 : f32 to vector<8x32xf32>
    %53 = arith.cmpf ogt, %51, %52 : vector<8x32xf32>
    %cst_27 = arith.constant 0.00999999977 : f32
    %54 = vector.broadcast %cst_27 : f32 to vector<8x32xf32>
    %55 = arith.mulf %54, %51 : vector<8x32xf32>
    %56 = arith.select %53, %51, %55 : vector<8x32xi1>, vector<8x32xf32>
    %c0_28 = arith.constant 0 : index
    %c0_29 = arith.constant 0 : index
    %57 = vector.load %arg11[%c0_28, %c0_29] : memref<32x8xf32, #tpu.memory_space<vmem>>, vector<32x8xf32>
    %cst_30 = arith.constant dense<0.000000e+00> : vector<8x8xf32>
    %58 = tpu.matmul %56, %57, %cst_30 {dimension_numbers = #tpu.dot_dimension_numbers<[1], [0], [0], [1], [0, 0, 1, 1], [], []>} : vector<8x32xf32>, vector<32x8xf32>, vector<8x8xf32> -> vector<8x8xf32>
    %c0_31 = arith.constant 0 : index
    %c0_32 = arith.constant 0 : index
    %59 = vector.load %arg12[%c0_31, %c0_32] : memref<1x8xf32, #tpu.memory_space<vmem>>, vector<1x8xf32>
    %60 = vector.broadcast %59 : vector<1x8xf32> to vector<8x8xf32>
    %61 = arith.addf %58, %60 : vector<8x8xf32>
    %cst_33 = arith.constant 0.000000e+00 : f32
    %62 = vector.broadcast %cst_33 : f32 to vector<8x128xf32>
    %c0_34 = arith.constant 0 : index
    %c0_35 = arith.constant 0 : index
    %63 = vector.load %arg13[%c0_34, %c0_35] : memref<8x128xf32, #tpu.memory_space<vmem>>, vector<8x128xf32>
    tpu.vector_store %arg13[%c0_34, %c0_35], %62 {strides = array<i32>} : memref<8x128xf32, #tpu.memory_space<vmem>>, vector<8x128xf32>,
    %c0_36 = arith.constant 0 : index
    %c0_37 = arith.constant 0 : index
    %64 = vector.load %arg13[%c0_36, %c0_37] : memref<8x128xf32, #tpu.memory_space<vmem>>, vector<8x8xf32>
    tpu.vector_store %arg13[%c0_36, %c0_37], %50 {strides = array<i32>} : memref<8x128xf32, #tpu.memory_space<vmem>>, vector<8x8xf32>,
    %c0_38 = arith.constant 0 : index
    %c8 = arith.constant 8 : index
    %65 = vector.load %arg13[%c0_38, %c8] : memref<8x128xf32, #tpu.memory_space<vmem>>, vector<8x32xf32>
    tpu.vector_store %arg13[%c0_38, %c8], %44 {strides = array<i32>} : memref<8x128xf32, #tpu.memory_space<vmem>>, vector<8x32xf32>,
    %c0_39 = arith.constant 0 : index
    %c40 = arith.constant 40 : index
    %66 = vector.load %arg13[%c0_39, %c40] : memref<8x128xf32, #tpu.memory_space<vmem>>, vector<8x8xf32>
    tpu.vector_store %arg13[%c0_39, %c40], %61 {strides = array<i32>} : memref<8x128xf32, #tpu.memory_space<vmem>>, vector<8x8xf32>,
    return
  }
  func.func @transform_0(%arg0: i32) -> (i32, i32) {
    %c0_i32 = arith.constant 0 : i32
    %c0_i32_0 = arith.constant 0 : i32
    return %arg0, %c0_i32 : i32, i32
  }
  func.func @transform_1(%arg0: i32) -> (i32, i32) {
    %c0_i32 = arith.constant 0 : i32
    %c0_i32_0 = arith.constant 0 : i32
    return %arg0, %c0_i32 : i32, i32
  }
  func.func @transform_2(%arg0: i32) -> (i32, i32) {
    %c0_i32 = arith.constant 0 : i32
    %c0_i32_0 = arith.constant 0 : i32
    %c0_i32_1 = arith.constant 0 : i32
    return %c0_i32, %c0_i32_0 : i32, i32
  }
  func.func @transform_3(%arg0: i32) -> (i32, i32) {
    %c0_i32 = arith.constant 0 : i32
    %c0_i32_0 = arith.constant 0 : i32
    %c0_i32_1 = arith.constant 0 : i32
    return %c0_i32, %c0_i32_0 : i32, i32
  }
  func.func @transform_4(%arg0: i32) -> (i32, i32) {
    %c0_i32 = arith.constant 0 : i32
    %c0_i32_0 = arith.constant 0 : i32
    %c0_i32_1 = arith.constant 0 : i32
    return %c0_i32, %c0_i32_0 : i32, i32
  }
  func.func @transform_5(%arg0: i32) -> (i32, i32) {
    %c0_i32 = arith.constant 0 : i32
    %c0_i32_0 = arith.constant 0 : i32
    %c0_i32_1 = arith.constant 0 : i32
    return %c0_i32, %c0_i32_0 : i32, i32
  }
  func.func @transform_6(%arg0: i32) -> (i32, i32) {
    %c0_i32 = arith.constant 0 : i32
    %c0_i32_0 = arith.constant 0 : i32
    %c0_i32_1 = arith.constant 0 : i32
    return %c0_i32, %c0_i32_0 : i32, i32
  }
  func.func @transform_7(%arg0: i32) -> (i32, i32) {
    %c0_i32 = arith.constant 0 : i32
    %c0_i32_0 = arith.constant 0 : i32
    %c0_i32_1 = arith.constant 0 : i32
    return %c0_i32, %c0_i32_0 : i32, i32
  }
  func.func @transform_8(%arg0: i32) -> (i32, i32) {
    %c0_i32 = arith.constant 0 : i32
    %c0_i32_0 = arith.constant 0 : i32
    %c0_i32_1 = arith.constant 0 : i32
    return %c0_i32, %c0_i32_0 : i32, i32
  }
  func.func @transform_9(%arg0: i32) -> (i32, i32) {
    %c0_i32 = arith.constant 0 : i32
    %c0_i32_0 = arith.constant 0 : i32
    %c0_i32_1 = arith.constant 0 : i32
    return %c0_i32, %c0_i32_0 : i32, i32
  }
  func.func @transform_10(%arg0: i32) -> (i32, i32) {
    %c0_i32 = arith.constant 0 : i32
    %c0_i32_0 = arith.constant 0 : i32
    %c0_i32_1 = arith.constant 0 : i32
    return %c0_i32, %c0_i32_0 : i32, i32
  }
  func.func @transform_11(%arg0: i32) -> (i32, i32) {
    %c0_i32 = arith.constant 0 : i32
    %c0_i32_0 = arith.constant 0 : i32
    %c0_i32_1 = arith.constant 0 : i32
    return %c0_i32, %c0_i32_0 : i32, i32
  }
  func.func @transform_12(%arg0: i32) -> (i32, i32) {
    %c0_i32 = arith.constant 0 : i32
    %c0_i32_0 = arith.constant 0 : i32
    return %arg0, %c0_i32 : i32, i32
  }
}

</mosaic_0001>

<llo_original>
// kernel: rnn_fc_forward.1
$region0: #{rnn_fc_forward.1}
  #allocation0 [shape = 'u32[]', space=smem, size = 0x4, offset = 0x4, fixed_abs, tag = 'smem constant byte address 0x4 - core index']
  #allocation1 [shape = 'u32[144,128]{1,0:T(1,128)}', space=vmem, size = 0x12000, scoped, tag = 'internal scratch']
  %s0 = inlined_call_operand.vmem [shape: f32[8,16], index: 0, kind: input, shape index: {}]
  %s1 = inlined_call_operand.vmem [shape: f32[8,32], index: 1, kind: input, shape index: {}]
  %s2 = inlined_call_operand.vmem [shape: f32[16,32], index: 2, kind: input, shape index: {}]
  %s3 = inlined_call_operand.vmem [shape: f32[1,32], index: 3, kind: input, shape index: {}]
  %s4 = inlined_call_operand.hbm [shape: f32[32,384], index: 4, kind: input, shape index: {}]
  %s5 = inlined_call_operand.vmem [shape: f32[1,384], index: 5, kind: input, shape index: {}]
  %s6 = inlined_call_operand.hbm [shape: f32[32,384], index: 6, kind: input, shape index: {}]
  %s7 = inlined_call_operand.vmem [shape: f32[1,384], index: 7, kind: input, shape index: {}]
  %s8 = inlined_call_operand.hbm [shape: f32[32,256], index: 8, kind: input, shape index: {}]
  %s9 = inlined_call_operand.vmem [shape: f32[1,256], index: 9, kind: input, shape index: {}]
  %s10 = inlined_call_operand.vmem [shape: f32[32,8], index: 10, kind: input, shape index: {}]
  %s11 = inlined_call_operand.vmem [shape: f32[1,8], index: 11, kind: input, shape index: {}]
  %s12 = inlined_call_operand.vmem [shape: f32[8,128], index: 12, kind: output, shape index: {}]
  %s13 = sld [smem:[#allocation0]]
  $region70: #{rnn_fc_forward.1} parent=0
    _
  %s15 = ssub.s32 1, %s13
  %s16 = scalar_select 0, %s15, %s13
  $region1: #{rnn_fc_forward.1} parent=0
    #allocation2 [shape = 'u8[49152]{0}', space=vmem, size = 0xc000, scoped, tag = 'input window, operand 4, single buffered']
    #allocation3 [shape = 's32[1]{0}', space=sflag, size = 0x4, scoped, tag = 'scoped memory for rnn_fc_forward.1']
    #allocation4 [shape = 'u8[49152]{0}', space=vmem, size = 0xc000, scoped, tag = 'input window, operand 6, single buffered']
    #allocation5 [shape = 's32[1]{0}', space=sflag, size = 0x4, scoped, tag = 'scoped memory for rnn_fc_forward.1']
    #allocation6 [shape = 'u8[32768]{0}', space=vmem, size = 0x8000, scoped, tag = 'input window, operand 8, single buffered']
    %17 = vsyncpa [#allocation3], 0
    %18 = vsyncpa [#allocation5], 0
    // Predicated region
    $region2: #{rnn_fc_forward.1} parent=1 // pred_check
      _
    $region3: #{rnn_fc_forward.1} parent=1 // pred_check_branch
      %20 = sbr.rel (0) target = $region5
    $region4: #{rnn_fc_forward.1} parent=1 // pred_region
      _
    $region5: #{rnn_fc_forward.1} parent=1 // pred_fallthru
      _
    // Predicated region
    $region6: #{rnn_fc_forward.1} parent=1 // pred_check
      _
    $region7: #{rnn_fc_forward.1} parent=1 // pred_check_branch
      %22 = sbr.rel (0) target = $region9
    $region8: #{rnn_fc_forward.1} parent=1 // pred_region
      _
    $region9: #{rnn_fc_forward.1} parent=1 // pred_fallthru
      _
    // Predicated region
    $region10: #{rnn_fc_forward.1} parent=1 // pred_check
      _
    $region11: #{rnn_fc_forward.1} parent=1 // pred_check_branch
      %24 = sbr.rel (0) target = $region13
    $region12: #{rnn_fc_forward.1} parent=1 // pred_region
      _
    $region13: #{rnn_fc_forward.1} parent=1 // pred_fallthru
      _
    // Predicated region
    $region14: #{rnn_fc_forward.1} parent=1 // pred_check
      _
    $region15: #{rnn_fc_forward.1} parent=1 // pred_check_branch
      %26 = sbr.rel (0) target = $region17
    $region16: #{rnn_fc_forward.1} parent=1 // pred_region
      _
    $region17: #{rnn_fc_forward.1} parent=1 // pred_fallthru
      _
    // Predicated region
    $region18: #{rnn_fc_forward.1} parent=1 // pred_check
      _
    $region19: #{rnn_fc_forward.1} parent=1 // pred_check_branch
      %28 = sbr.rel (0) target = $region21
    $region20: #{rnn_fc_forward.1} parent=1 // pred_region
      %s30 = ssub.s32 1536, 1536
      %31 = vsyncadd [#allocation3], %s30
      %s32 = sshll.u32 [#allocation2], 4
      %s33 = int_to_ptr.vmem [resolvable:$true] %s32
      %38 = dma.hbm_to_vmem [thread:$0]  %s4, 1536, %s33, [#allocation3], 384, 384, 24
    $region21: #{rnn_fc_forward.1} parent=1 // pred_fallthru
      _
    // Predicated region
    $region22: #{rnn_fc_forward.1} parent=1 // pred_check
      _
    $region23: #{rnn_fc_forward.1} parent=1 // pred_check_branch
      %40 = sbr.rel (0) target = $region25
    $region24: #{rnn_fc_forward.1} parent=1 // pred_region
      _
    $region25: #{rnn_fc_forward.1} parent=1 // pred_fallthru
      _
    // Predicated region
    $region26: #{rnn_fc_forward.1} parent=1 // pred_check
      _
    $region27: #{rnn_fc_forward.1} parent=1 // pred_check_branch
      %42 = sbr.rel (0) target = $region29
    $region28: #{rnn_fc_forward.1} parent=1 // pred_region
      %s44 = ssub.s32 1536, 1536
      %45 = vsyncadd [#allocation5], %s44
      %s46 = sshll.u32 [#allocation4], 4
      %s47 = int_to_ptr.vmem [resolvable:$true] %s46
      %52 = dma.hbm_to_vmem [thread:$0]  %s6, 1536, %s47, [#allocation5], 384, 384, 24
    $region29: #{rnn_fc_forward.1} parent=1 // pred_fallthru
      _
    // Predicated region
    $region30: #{rnn_fc_forward.1} parent=1 // pred_check
      _
    $region31: #{rnn_fc_forward.1} parent=1 // pred_check_branch
      %54 = sbr.rel (0) target = $region33
    $region32: #{rnn_fc_forward.1} parent=1 // pred_region
      _
    $region33: #{rnn_fc_forward.1} parent=1 // pred_fallthru
      _
    // Predicated region
    $region34: #{rnn_fc_forward.1} parent=1 // pred_check
      _
    $region35: #{rnn_fc_forward.1} parent=1 // pred_check_branch
      %56 = sbr.rel (0) target = $region37
    $region36: #{rnn_fc_forward.1} parent=1 // pred_region
      %s58 = ssub.s32 1024, 1024
      %59 = vsyncadd [#allocation5], %s58
      %s60 = sshll.u32 [#allocation6], 4
      %s61 = int_to_ptr.vmem [resolvable:$true] %s60
      %66 = dma.hbm_to_vmem [thread:$0]  %s8, 1024, %s61, [#allocation5], 256, 256, 16
    $region37: #{rnn_fc_forward.1} parent=1 // pred_fallthru
      _
    // Predicated region
    $region38: #{rnn_fc_forward.1} parent=1 // pred_check
      _
    $region39: #{rnn_fc_forward.1} parent=1 // pred_check_branch
      %68 = sbr.rel (0) target = $region41
    $region40: #{rnn_fc_forward.1} parent=1 // pred_region
      _
    $region41: #{rnn_fc_forward.1} parent=1 // pred_fallthru
      _
    // Predicated region
    $region42: #{rnn_fc_forward.1} parent=1 // pred_check
      _
    $region43: #{rnn_fc_forward.1} parent=1 // pred_check_branch
      %70 = sbr.rel (0) target = $region45
    $region44: #{rnn_fc_forward.1} parent=1 // pred_region
      _
    $region45: #{rnn_fc_forward.1} parent=1 // pred_fallthru
      _
    // Predicated region
    $region46: #{rnn_fc_forward.1} parent=1 // pred_check
      _
    $region47: #{rnn_fc_forward.1} parent=1 // pred_check_branch
      %72 = sbr.rel (0) target = $region49
    $region48: #{rnn_fc_forward.1} parent=1 // pred_region
      _
    $region49: #{rnn_fc_forward.1} parent=1 // pred_fallthru
      _
    // Predicated region
    $region50: #{rnn_fc_forward.1} parent=1 // pred_check
      _
    $region51: #{rnn_fc_forward.1} parent=1 // pred_check_branch
      %74 = sbr.rel (0) target = $region53
    $region52: #{rnn_fc_forward.1} parent=1 // pred_region
      %75 = dma.done [#allocation3], 1536
    $region53: #{rnn_fc_forward.1} parent=1 // pred_fallthru
      _
    // Predicated region
    $region54: #{rnn_fc_forward.1} parent=1 // pred_check
      _
    $region55: #{rnn_fc_forward.1} parent=1 // pred_check_branch
      %77 = sbr.rel (0) target = $region57
    $region56: #{rnn_fc_forward.1} parent=1 // pred_region
      %78 = dma.done [#allocation5], 1536
    $region57: #{rnn_fc_forward.1} parent=1 // pred_fallthru
      _
    // Predicated region
    $region58: #{rnn_fc_forward.1} parent=1 // pred_check
      _
    $region59: #{rnn_fc_forward.1} parent=1 // pred_check_branch
      %80 = sbr.rel (0) target = $region61
    $region60: #{rnn_fc_forward.1} parent=1 // pred_region
      %81 = dma.done [#allocation5], 1024
    $region61: #{rnn_fc_forward.1} parent=1 // pred_fallthru
      _
    %v82 = vld [vmem:[%s0] sm:$0xff]
    %v83 = vld [vmem:[%s1] sm:$0xff]
    %v84 = vld [vmem:[%s2] sm:$0xff]
    %v85 = vld [vmem:[%s2 + $0x8] sm:$0xff]
    %v86 = vld [vmem:[%s3] sm:$0x1]
    %v88 = vlaneseq
    %v89 = vshrl.u32 %v88, 7
    %v90 = vsub.s32 0, %v89
    %v91 = vrot.slane %v86, %v90
    %vm93 = vcmask 130048
    %v95 = vsel %vm93, %v82, 0
    %97 = vmatprep.subr.mxu0 0.0
    %98 = vmatpush1.msra.mxu0 0.0
    %99 = vmatprep.subr.mxu0 0.0
    %100 = vmatpush1.msra.mxu0 0.0
    %101 = vmatprep.subr.mxu0 0.0
    %102 = vmatpush1.msra.mxu0 0.0
    %103 = vmatprep.subr.mxu0 0.0
    %104 = vmatpush1.msra.mxu0 0.0
    %105 = vmatprep.subr.mxu0 0.0
    %106 = vmatpush1.msra.mxu0 0.0
    %107 = vmatprep.subr.mxu0 0.0
    %108 = vmatpush1.msra.mxu0 0.0
    %109 = vmatprep.subr.mxu0 0.0
    %110 = vmatpush1.msra.mxu0 0.0
    %111 = vmatprep.subr.mxu0 0.0
    %112 = vmatpush1.msra.mxu0 0.0
    %113 = vmatprep.subr.mxu0 0.0
    %114 = vmatpush1.msra.mxu0 0.0
    %115 = vmatprep.subr.mxu0 0.0
    %116 = vmatpush1.msra.mxu0 0.0
    %117 = vmatprep.subr.mxu0 0.0
    %118 = vmatpush1.msra.mxu0 0.0
    %119 = vmatprep.subr.mxu0 0.0
    %120 = vmatpush1.msra.mxu0 0.0
    %121 = vmatprep.subr.mxu0 0.0
    %122 = vmatpush1.msra.mxu0 0.0
    %123 = vmatprep.subr.mxu0 0.0
    %124 = vmatpush1.msra.mxu0 0.0
    %125 = vmatprep.subr.mxu0 0.0
    %126 = vmatpush1.msra.mxu0 %v85
    %127 = vmatprep.subr.mxu0 0.0
    %128 = vmatpush1.msra.mxu0 %v84
    %129 = vmatprep.subr.mxu0 0.0
    %130 = vmatpush2.msra.mxu0 0.0
    %131 = vmatprep.subr.mxu0 0.0
    %132 = vmatpush2.msra.mxu0 0.0
    %133 = vmatprep.subr.mxu0 0.0
    %134 = vmatpush2.msra.mxu0 0.0
    %135 = vmatprep.subr.mxu0 0.0
    %136 = vmatpush2.msra.mxu0 0.0
    %137 = vmatprep.subr.mxu0 0.0
    %138 = vmatpush2.msra.mxu0 0.0
    %139 = vmatprep.subr.mxu0 0.0
    %140 = vmatpush2.msra.mxu0 0.0
    %141 = vmatprep.subr.mxu0 0.0
    %142 = vmatpush2.msra.mxu0 0.0
    %143 = vmatprep.subr.mxu0 0.0
    %144 = vmatpush2.msra.mxu0 0.0
    %145 = vmatprep.subr.mxu0 0.0
    %146 = vmatpush2.msra.mxu0 0.0
    %147 = vmatprep.subr.mxu0 0.0
    %148 = vmatpush2.msra.mxu0 0.0
    %149 = vmatprep.subr.mxu0 0.0
    %150 = vmatpush2.msra.mxu0 0.0
    %151 = vmatprep.subr.mxu0 0.0
    %152 = vmatpush2.msra.mxu0 0.0
    %153 = vmatprep.subr.mxu0 0.0
    %154 = vmatpush2.msra.mxu0 0.0
    %155 = vmatprep.subr.mxu0 0.0
    %156 = vmatpush2.msra.mxu0 0.0
    %157 = vmatprep.subr.mxu0 0.0
    %158 = vmatpush2.msra.mxu0 0.0
    %159 = vmatprep.subr.mxu0 0.0
    %160 = vmatpush2.msra.mxu0 0.0
    %161 = vmatprep.mubr.f32.mxu0 0.0
    %162 = vmatmul.mubr.f32.gmra.mxu0 %v95
    %v163 = vpop.f32.mrf.mxu0
    %v164 = vadd.f32 %v91, %v163
    %v165 = vpop.f32.mrf.mxu0
    %166 = vdwg.mxu0
    %v167 = vmax.f32 %v164, 0.0
    %v168 = vld [vmem:[#allocation2] sm:$0xff]
    %v169 = vld [vmem:[#allocation2 + $0x8] sm:$0xff]
    %v170 = vld [vmem:[#allocation2 + $0x10] sm:$0xff]
    %v171 = vld [vmem:[#allocation2 + $0x18] sm:$0xff]
    %v172 = vld [vmem:[#allocation2 + $0x20] sm:$0xff]
    %v173 = vld [vmem:[#allocation2 + $0x28] sm:$0xff]
    %v174 = vld [vmem:[#allocation2 + $0x30] sm:$0xff]
    %v175 = vld [vmem:[#allocation2 + $0x38] sm:$0xff]
    %v176 = vld [vmem:[#allocation2 + $0x40] sm:$0xff]
    %v177 = vld [vmem:[#allocation2 + $0x48] sm:$0xff]
    %v178 = vld [vmem:[#allocation2 + $0x50] sm:$0xff]
    %v179 = vld [vmem:[#allocation2 + $0x58] sm:$0xff]
    %v180 = vld [vmem:[%s5] sm:$0x7]
    %v182 = vlaneseq
    %v183 = vshrl.u32 %v182, 7
    %v184 = vsub.s32 0, %v183
    %v185 = vrot.slane %v180, %v184
    %v186 = vlaneseq
    %v187 = vshrl.u32 %v186, 7
    %v188 = vsub.s32 1, %v187
    %v189 = vrot.slane %v180, %v188
    %v190 = vlaneseq
    %v191 = vshrl.u32 %v190, 7
    %v192 = vsub.s32 2, %v191
    %v193 = vrot.slane %v180, %v192
    %vm197 = vcmask 261120
    %v199 = vsel %vm197, %v167, 0
    %201 = vmatprep.subr.mxu0 0.0
    %202 = vmatpush1.msra.mxu0 0.0
    %203 = vmatprep.subr.mxu0 0.0
    %204 = vmatpush1.msra.mxu0 0.0
    %205 = vmatprep.subr.mxu0 0.0
    %206 = vmatpush1.msra.mxu0 0.0
    %207 = vmatprep.subr.mxu0 0.0
    %208 = vmatpush1.msra.mxu0 0.0
    %209 = vmatprep.subr.mxu0 0.0
    %210 = vmatpush1.msra.mxu0 0.0
    %211 = vmatprep.subr.mxu0 0.0
    %212 = vmatpush1.msra.mxu0 0.0
    %213 = vmatprep.subr.mxu0 0.0
    %214 = vmatpush1.msra.mxu0 0.0
    %215 = vmatprep.subr.mxu0 0.0
    %216 = vmatpush1.msra.mxu0 0.0
    %217 = vmatprep.subr.mxu0 0.0
    %218 = vmatpush1.msra.mxu0 0.0
    %219 = vmatprep.subr.mxu0 0.0
    %220 = vmatpush1.msra.mxu0 0.0
    %221 = vmatprep.subr.mxu0 0.0
    %222 = vmatpush1.msra.mxu0 0.0
    %223 = vmatprep.subr.mxu0 0.0
    %224 = vmatpush1.msra.mxu0 0.0
    %225 = vmatprep.subr.mxu0 %v178
    %226 = vmatpush1.msra.mxu0 %v177
    %227 = vmatprep.subr.mxu0 %v175
    %228 = vmatpush1.msra.mxu0 %v174
    %229 = vmatprep.subr.mxu0 %v172
    %230 = vmatpush1.msra.mxu0 %v171
    %231 = vmatprep.subr.mxu0 %v169
    %232 = vmatpush1.msra.mxu0 %v168
    %233 = vmatprep.subr.mxu0 0.0
    %234 = vmatpush2.msra.mxu0 0.0
    %235 = vmatprep.subr.mxu0 0.0
    %236 = vmatpush2.msra.mxu0 0.0
    %237 = vmatprep.subr.mxu0 0.0
    %238 = vmatpush2.msra.mxu0 0.0
    %239 = vmatprep.subr.mxu0 0.0
    %240 = vmatpush2.msra.mxu0 0.0
    %241 = vmatprep.subr.mxu0 0.0
    %242 = vmatpush2.msra.mxu0 0.0
    %243 = vmatprep.subr.mxu0 0.0
    %244 = vmatpush2.msra.mxu0 0.0
    %245 = vmatprep.subr.mxu0 0.0
    %246 = vmatpush2.msra.mxu0 0.0
    %247 = vmatprep.subr.mxu0 0.0
    %248 = vmatpush2.msra.mxu0 0.0
    %249 = vmatprep.subr.mxu0 0.0
    %250 = vmatpush2.msra.mxu0 0.0
    %251 = vmatprep.subr.mxu0 0.0
    %252 = vmatpush2.msra.mxu0 0.0
    %253 = vmatprep.subr.mxu0 0.0
    %254 = vmatpush2.msra.mxu0 0.0
    %255 = vmatprep.subr.mxu0 0.0
    %256 = vmatpush2.msra.mxu0 0.0
    %257 = vmatprep.subr.mxu0 0.0
    %258 = vmatpush2.msra.mxu0 0.0
    %259 = vmatprep.subr.mxu0 0.0
    %260 = vmatpush2.msra.mxu0 0.0
    %261 = vmatprep.subr.mxu0 0.0
    %262 = vmatpush2.msra.mxu0 0.0
    %263 = vmatprep.subr.mxu0 0.0
    %264 = vmatpush2.msra.mxu0 0.0
    %265 = vmatprep.mubr.f32.mxu0 0.0
    %266 = vmatmul.mubr.f32.gmra.mxu0 %v199
    %v267 = vpop.f32.mrf.mxu0
    %v268 = vadd.f32 %v185, %v267
    %v269 = vpop.f32.mrf.mxu0
    %v270 = vadd.f32 %v189, %v269
    %271 = vdwg.mxu0
    %272 = vmatprep.subr.mxu0 0.0
    %273 = vmatpush1.msra.mxu0 0.0
    %274 = vmatprep.subr.mxu0 0.0
    %275 = vmatpush1.msra.mxu0 0.0
    %276 = vmatprep.subr.mxu0 0.0
    %277 = vmatpush1.msra.mxu0 0.0
    %278 = vmatprep.subr.mxu0 0.0
    %279 = vmatpush1.msra.mxu0 0.0
    %280 = vmatprep.subr.mxu0 0.0
    %281 = vmatpush1.msra.mxu0 0.0
    %282 = vmatprep.subr.mxu0 0.0
    %283 = vmatpush1.msra.mxu0 0.0
    %284 = vmatprep.subr.mxu0 0.0
    %285 = vmatpush1.msra.mxu0 0.0
    %286 = vmatprep.subr.mxu0 0.0
    %287 = vmatpush1.msra.mxu0 0.0
    %288 = vmatprep.subr.mxu0 0.0
    %289 = vmatpush1.msra.mxu0 0.0
    %290 = vmatprep.subr.mxu0 0.0
    %291 = vmatpush1.msra.mxu0 0.0
    %292 = vmatprep.subr.mxu0 0.0
    %293 = vmatpush1.msra.mxu0 0.0
    %294 = vmatprep.subr.mxu0 0.0
    %295 = vmatpush1.msra.mxu0 0.0
    %296 = vmatprep.subr.mxu0 0.0
    %297 = vmatpush1.msra.mxu0 %v179
    %298 = vmatprep.subr.mxu0 0.0
    %299 = vmatpush1.msra.mxu0 %v176
    %300 = vmatprep.subr.mxu0 0.0
    %301 = vmatpush1.msra.mxu0 %v173
    %302 = vmatprep.subr.mxu0 0.0
    %303 = vmatpush1.msra.mxu0 %v170
    %304 = vmatprep.subr.mxu0 0.0
    %305 = vmatpush2.msra.mxu0 0.0
    %306 = vmatprep.subr.mxu0 0.0
    %307 = vmatpush2.msra.mxu0 0.0
    %308 = vmatprep.subr.mxu0 0.0
    %309 = vmatpush2.msra.mxu0 0.0
    %310 = vmatprep.subr.mxu0 0.0
    %311 = vmatpush2.msra.mxu0 0.0
    %312 = vmatprep.subr.mxu0 0.0
    %313 = vmatpush2.msra.mxu0 0.0
    %314 = vmatprep.subr.mxu0 0.0
    %315 = vmatpush2.msra.mxu0 0.0
    %316 = vmatprep.subr.mxu0 0.0
    %317 = vmatpush2.msra.mxu0 0.0
    %318 = vmatprep.subr.mxu0 0.0
    %319 = vmatpush2.msra.mxu0 0.0
    %320 = vmatprep.subr.mxu0 0.0
    %321 = vmatpush2.msra.mxu0 0.0
    %322 = vmatprep.subr.mxu0 0.0
    %323 = vmatpush2.msra.mxu0 0.0
    %324 = vmatprep.subr.mxu0 0.0
    %325 = vmatpush2.msra.mxu0 0.0
    %326 = vmatprep.subr.mxu0 0.0
    %327 = vmatpush2.msra.mxu0 0.0
    %328 = vmatprep.subr.mxu0 0.0
    %329 = vmatpush2.msra.mxu0 0.0
    %330 = vmatprep.subr.mxu0 0.0
    %331 = vmatpush2.msra.mxu0 0.0
    %332 = vmatprep.subr.mxu0 0.0
    %333 = vmatpush2.msra.mxu0 0.0
    %334 = vmatprep.subr.mxu0 0.0
    %335 = vmatpush2.msra.mxu0 0.0
    %336 = vmatprep.mubr.f32.mxu0 0.0
    %337 = vmatmul.mubr.f32.gmra.mxu0 %v199
    %v338 = vpop.f32.mrf.mxu0
    %v339 = vadd.f32 %v193, %v338
    %v340 = vpop.f32.mrf.mxu0
    %341 = vdwg.mxu0
    %v342 = vld [vmem:[#allocation4] sm:$0xff]
    %v343 = vld [vmem:[#allocation4 + $0x8] sm:$0xff]
    %v344 = vld [vmem:[#allocation4 + $0x10] sm:$0xff]
    %v345 = vld [vmem:[#allocation4 + $0x18] sm:$0xff]
    %v346 = vld [vmem:[#allocation4 + $0x20] sm:$0xff]
    %v347 = vld [vmem:[#allocation4 + $0x28] sm:$0xff]
    %v348 = vld [vmem:[#allocation4 + $0x30] sm:$0xff]
    %v349 = vld [vmem:[#allocation4 + $0x38] sm:$0xff]
    %v350 = vld [vmem:[#allocation4 + $0x40] sm:$0xff]
    %v351 = vld [vmem:[#allocation4 + $0x48] sm:$0xff]
    %v352 = vld [vmem:[#allocation4 + $0x50] sm:$0xff]
    %v353 = vld [vmem:[#allocation4 + $0x58] sm:$0xff]
    %v354 = vld [vmem:[%s7] sm:$0x7]
    %v356 = vlaneseq
    %v357 = vshrl.u32 %v356, 7
    %v358 = vsub.s32 0, %v357
    %v359 = vrot.slane %v354, %v358
    %v360 = vlaneseq
    %v361 = vshrl.u32 %v360, 7
    %v362 = vsub.s32 1, %v361
    %v363 = vrot.slane %v354, %v362
    %v364 = vlaneseq
    %v365 = vshrl.u32 %v364, 7
    %v366 = vsub.s32 2, %v365
    %v367 = vrot.slane %v354, %v366
    %v372 = vsel %vm197, %v83, 0
    %374 = vmatprep.subr.mxu0 0.0
    %375 = vmatpush1.msra.mxu0 0.0
    %376 = vmatprep.subr.mxu0 0.0
    %377 = vmatpush1.msra.mxu0 0.0
    %378 = vmatprep.subr.mxu0 0.0
    %379 = vmatpush1.msra.mxu0 0.0
    %380 = vmatprep.subr.mxu0 0.0
    %381 = vmatpush1.msra.mxu0 0.0
    %382 = vmatprep.subr.mxu0 0.0
    %383 = vmatpush1.msra.mxu0 0.0
    %384 = vmatprep.subr.mxu0 0.0
    %385 = vmatpush1.msra.mxu0 0.0
    %386 = vmatprep.subr.mxu0 0.0
    %387 = vmatpush1.msra.mxu0 0.0
    %388 = vmatprep.subr.mxu0 0.0
    %389 = vmatpush1.msra.mxu0 0.0
    %390 = vmatprep.subr.mxu0 0.0
    %391 = vmatpush1.msra.mxu0 0.0
    %392 = vmatprep.subr.mxu0 0.0
    %393 = vmatpush1.msra.mxu0 0.0
    %394 = vmatprep.subr.mxu0 0.0
    %395 = vmatpush1.msra.mxu0 0.0
    %396 = vmatprep.subr.mxu0 0.0
    %397 = vmatpush1.msra.mxu0 0.0
    %398 = vmatprep.subr.mxu0 %v352
    %399 = vmatpush1.msra.mxu0 %v351
    %400 = vmatprep.subr.mxu0 %v349
    %401 = vmatpush1.msra.mxu0 %v348
    %402 = vmatprep.subr.mxu0 %v346
    %403 = vmatpush1.msra.mxu0 %v345
    %404 = vmatprep.subr.mxu0 %v343
    %405 = vmatpush1.msra.mxu0 %v342
    %406 = vmatprep.subr.mxu0 0.0
    %407 = vmatpush2.msra.mxu0 0.0
    %408 = vmatprep.subr.mxu0 0.0
    %409 = vmatpush2.msra.mxu0 0.0
    %410 = vmatprep.subr.mxu0 0.0
    %411 = vmatpush2.msra.mxu0 0.0
    %412 = vmatprep.subr.mxu0 0.0
    %413 = vmatpush2.msra.mxu0 0.0
    %414 = vmatprep.subr.mxu0 0.0
    %415 = vmatpush2.msra.mxu0 0.0
    %416 = vmatprep.subr.mxu0 0.0
    %417 = vmatpush2.msra.mxu0 0.0
    %418 = vmatprep.subr.mxu0 0.0
    %419 = vmatpush2.msra.mxu0 0.0
    %420 = vmatprep.subr.mxu0 0.0
    %421 = vmatpush2.msra.mxu0 0.0
    %422 = vmatprep.subr.mxu0 0.0
    %423 = vmatpush2.msra.mxu0 0.0
    %424 = vmatprep.subr.mxu0 0.0
    %425 = vmatpush2.msra.mxu0 0.0
    %426 = vmatprep.subr.mxu0 0.0
    %427 = vmatpush2.msra.mxu0 0.0
    %428 = vmatprep.subr.mxu0 0.0
    %429 = vmatpush2.msra.mxu0 0.0
    %430 = vmatprep.subr.mxu0 0.0
    %431 = vmatpush2.msra.mxu0 0.0
    %432 = vmatprep.subr.mxu0 0.0
    %433 = vmatpush2.msra.mxu0 0.0
    %434 = vmatprep.subr.mxu0 0.0
    %435 = vmatpush2.msra.mxu0 0.0
    %436 = vmatprep.subr.mxu0 0.0
    %437 = vmatpush2.msra.mxu0 0.0
    %438 = vmatprep.mubr.f32.mxu0 0.0
    %439 = vmatmul.mubr.f32.gmra.mxu0 %v372
    %v440 = vpop.f32.mrf.mxu0
    %v441 = vadd.f32 %v359, %v440
    %v442 = vpop.f32.mrf.mxu0
    %v443 = vadd.f32 %v363, %v442
    %444 = vdwg.mxu0
    %445 = vmatprep.subr.mxu0 0.0
    %446 = vmatpush1.msra.mxu0 0.0
    %447 = vmatprep.subr.mxu0 0.0
    %448 = vmatpush1.msra.mxu0 0.0
    %449 = vmatprep.subr.mxu0 0.0
    %450 = vmatpush1.msra.mxu0 0.0
    %451 = vmatprep.subr.mxu0 0.0
    %452 = vmatpush1.msra.mxu0 0.0
    %453 = vmatprep.subr.mxu0 0.0
    %454 = vmatpush1.msra.mxu0 0.0
    %455 = vmatprep.subr.mxu0 0.0
    %456 = vmatpush1.msra.mxu0 0.0
    %457 = vmatprep.subr.mxu0 0.0
    %458 = vmatpush1.msra.mxu0 0.0
    %459 = vmatprep.subr.mxu0 0.0
    %460 = vmatpush1.msra.mxu0 0.0
    %461 = vmatprep.subr.mxu0 0.0
    %462 = vmatpush1.msra.mxu0 0.0
    %463 = vmatprep.subr.mxu0 0.0
    %464 = vmatpush1.msra.mxu0 0.0
    %465 = vmatprep.subr.mxu0 0.0
    %466 = vmatpush1.msra.mxu0 0.0
    %467 = vmatprep.subr.mxu0 0.0
    %468 = vmatpush1.msra.mxu0 0.0
    %469 = vmatprep.subr.mxu0 0.0
    %470 = vmatpush1.msra.mxu0 %v353
    %471 = vmatprep.subr.mxu0 0.0
    %472 = vmatpush1.msra.mxu0 %v350
    %473 = vmatprep.subr.mxu0 0.0
    %474 = vmatpush1.msra.mxu0 %v347
    %475 = vmatprep.subr.mxu0 0.0
    %476 = vmatpush1.msra.mxu0 %v344
    %477 = vmatprep.subr.mxu0 0.0
    %478 = vmatpush2.msra.mxu0 0.0
    %479 = vmatprep.subr.mxu0 0.0
    %480 = vmatpush2.msra.mxu0 0.0
    %481 = vmatprep.subr.mxu0 0.0
    %482 = vmatpush2.msra.mxu0 0.0
    %483 = vmatprep.subr.mxu0 0.0
    %484 = vmatpush2.msra.mxu0 0.0
    %485 = vmatprep.subr.mxu0 0.0
    %486 = vmatpush2.msra.mxu0 0.0
    %487 = vmatprep.subr.mxu0 0.0
    %488 = vmatpush2.msra.mxu0 0.0
    %489 = vmatprep.subr.mxu0 0.0
    %490 = vmatpush2.msra.mxu0 0.0
    %491 = vmatprep.subr.mxu0 0.0
    %492 = vmatpush2.msra.mxu0 0.0
    %493 = vmatprep.subr.mxu0 0.0
    %494 = vmatpush2.msra.mxu0 0.0
    %495 = vmatprep.subr.mxu0 0.0
    %496 = vmatpush2.msra.mxu0 0.0
    %497 = vmatprep.subr.mxu0 0.0
    %498 = vmatpush2.msra.mxu0 0.0
    %499 = vmatprep.subr.mxu0 0.0
    %500 = vmatpush2.msra.mxu0 0.0
    %501 = vmatprep.subr.mxu0 0.0
    %502 = vmatpush2.msra.mxu0 0.0
    %503 = vmatprep.subr.mxu0 0.0
    %504 = vmatpush2.msra.mxu0 0.0
    %505 = vmatprep.subr.mxu0 0.0
    %506 = vmatpush2.msra.mxu0 0.0
    %507 = vmatprep.subr.mxu0 0.0
    %508 = vmatpush2.msra.mxu0 0.0
    %509 = vmatprep.mubr.f32.mxu0 0.0
    %510 = vmatmul.mubr.f32.gmra.mxu0 %v372
    %v511 = vpop.f32.mrf.mxu0
    %v512 = vadd.f32 %v367, %v511
    %v513 = vpop.f32.mrf.mxu0
    %514 = vdwg.mxu0
    %v515 = vadd.f32 %v268, %v441
    %v516 = vxor.u32 %v515, 2147483648
    %v517 = vmul.f32 %v516, 1.442695
    %v518 = vpow.pop %v517
    %v519 = vadd.f32 %v518, 1.0
    %v520 = vrcp.pop %v519
    %v521 = vmul.f32 1.0, %v520
    %v522 = vadd.f32 %v270, %v443
    %v523 = vxor.u32 %v522, 2147483648
    %v524 = vmul.f32 %v523, 1.442695
    %v525 = vpow.pop %v524
    %v526 = vadd.f32 %v525, 1.0
    %v527 = vrcp.pop %v526
    %v528 = vmul.f32 1.0, %v527
    %v529 = vmul.f32 %v521, %v512
    %v530 = vadd.f32 %v339, %v529
    %v531 = vtanh.pop %v530
    %v532 = vsub.f32 1.0, %v528
    %v533 = vmul.f32 %v532, %v531
    %v534 = vmul.f32 %v528, %v83
    %v535 = vadd.f32 %v533, %v534
    %v536 = vld [vmem:[#allocation6] sm:$0xff]
    %v537 = vld [vmem:[#allocation6 + $0x8] sm:$0xff]
    %v538 = vld [vmem:[#allocation6 + $0x10] sm:$0xff]
    %v539 = vld [vmem:[#allocation6 + $0x18] sm:$0xff]
    %v540 = vld [vmem:[#allocation6 + $0x20] sm:$0xff]
    %v541 = vld [vmem:[#allocation6 + $0x28] sm:$0xff]
    %v542 = vld [vmem:[#allocation6 + $0x30] sm:$0xff]
    %v543 = vld [vmem:[#allocation6 + $0x38] sm:$0xff]
    %v544 = vld [vmem:[%s9] sm:$0x3]
    %v546 = vlaneseq
    %v547 = vshrl.u32 %v546, 7
    %v548 = vsub.s32 0, %v547
    %v549 = vrot.slane %v544, %v548
    %v550 = vlaneseq
    %v551 = vshrl.u32 %v550, 7
    %v552 = vsub.s32 1, %v551
    %v553 = vrot.slane %v544, %v552
    %v557 = vsel %vm197, %v535, 0
    %559 = vmatprep.subr.mxu0 0.0
    %560 = vmatpush1.msra.mxu0 0.0
    %561 = vmatprep.subr.mxu0 0.0
    %562 = vmatpush1.msra.mxu0 0.0
    %563 = vmatprep.subr.mxu0 0.0
    %564 = vmatpush1.msra.mxu0 0.0
    %565 = vmatprep.subr.mxu0 0.0
    %566 = vmatpush1.msra.mxu0 0.0
    %567 = vmatprep.subr.mxu0 0.0
    %568 = vmatpush1.msra.mxu0 0.0
    %569 = vmatprep.subr.mxu0 0.0
    %570 = vmatpush1.msra.mxu0 0.0
    %571 = vmatprep.subr.mxu0 0.0
    %572 = vmatpush1.msra.mxu0 0.0
    %573 = vmatprep.subr.mxu0 0.0
    %574 = vmatpush1.msra.mxu0 0.0
    %575 = vmatprep.subr.mxu0 0.0
    %576 = vmatpush1.msra.mxu0 0.0
    %577 = vmatprep.subr.mxu0 0.0
    %578 = vmatpush1.msra.mxu0 0.0
    %579 = vmatprep.subr.mxu0 0.0
    %580 = vmatpush1.msra.mxu0 0.0
    %581 = vmatprep.subr.mxu0 0.0
    %582 = vmatpush1.msra.mxu0 0.0
    %583 = vmatprep.subr.mxu0 %v543
    %584 = vmatpush1.msra.mxu0 %v542
    %585 = vmatprep.subr.mxu0 %v541
    %586 = vmatpush1.msra.mxu0 %v540
    %587 = vmatprep.subr.mxu0 %v539
    %588 = vmatpush1.msra.mxu0 %v538
    %589 = vmatprep.subr.mxu0 %v537
    %590 = vmatpush1.msra.mxu0 %v536
    %591 = vmatprep.subr.mxu0 0.0
    %592 = vmatpush2.msra.mxu0 0.0
    %593 = vmatprep.subr.mxu0 0.0
    %594 = vmatpush2.msra.mxu0 0.0
    %595 = vmatprep.subr.mxu0 0.0
    %596 = vmatpush2.msra.mxu0 0.0
    %597 = vmatprep.subr.mxu0 0.0
    %598 = vmatpush2.msra.mxu0 0.0
    %599 = vmatprep.subr.mxu0 0.0
    %600 = vmatpush2.msra.mxu0 0.0
    %601 = vmatprep.subr.mxu0 0.0
    %602 = vmatpush2.msra.mxu0 0.0
    %603 = vmatprep.subr.mxu0 0.0
    %604 = vmatpush2.msra.mxu0 0.0
    %605 = vmatprep.subr.mxu0 0.0
    %606 = vmatpush2.msra.mxu0 0.0
    %607 = vmatprep.subr.mxu0 0.0
    %608 = vmatpush2.msra.mxu0 0.0
    %609 = vmatprep.subr.mxu0 0.0
    %610 = vmatpush2.msra.mxu0 0.0
    %611 = vmatprep.subr.mxu0 0.0
    %612 = vmatpush2.msra.mxu0 0.0
    %613 = vmatprep.subr.mxu0 0.0
    %614 = vmatpush2.msra.mxu0 0.0
    %615 = vmatprep.subr.mxu0 0.0
    %616 = vmatpush2.msra.mxu0 0.0
    %617 = vmatprep.subr.mxu0 0.0
    %618 = vmatpush2.msra.mxu0 0.0
    %619 = vmatprep.subr.mxu0 0.0
    %620 = vmatpush2.msra.mxu0 0.0
    %621 = vmatprep.subr.mxu0 0.0
    %622 = vmatpush2.msra.mxu0 0.0
    %623 = vmatprep.mubr.f32.mxu0 0.0
    %624 = vmatmul.mubr.f32.gmra.mxu0 %v557
    %v625 = vpop.f32.mrf.mxu0
    %v626 = vadd.f32 %v549, %v625
    %v627 = vpop.f32.mrf.mxu0
    %v628 = vadd.f32 %v553, %v627
    %629 = vdwg.mxu0
    %vm630 = vcmp.gt.f32.partialorder %v628, 0.0
    %v631 = vmul.f32 %v628, 0.01
    %v632 = vsel %vm630, %v628, %v631
    %v633 = vld [vmem:[%s10] sm:$0xff]
    %v634 = vld [vmem:[%s10 + $0x8] sm:$0xff]
    %v635 = vld [vmem:[%s10 + $0x10] sm:$0xff]
    %v636 = vld [vmem:[%s10 + $0x18] sm:$0xff]
    %v637 = vld [vmem:[%s11] sm:$0x1]
    %v639 = vlaneseq
    %v640 = vshrl.u32 %v639, 7
    %v641 = vsub.s32 0, %v640
    %v642 = vrot.slane %v637, %v641
    %v645 = vsel %vm197, %v632, 0
    %647 = vmatprep.subr.mxu0 0.0
    %648 = vmatpush1.msra.mxu0 0.0
    %649 = vmatprep.subr.mxu0 0.0
    %650 = vmatpush1.msra.mxu0 0.0
    %651 = vmatprep.subr.mxu0 0.0
    %652 = vmatpush1.msra.mxu0 0.0
    %653 = vmatprep.subr.mxu0 0.0
    %654 = vmatpush1.msra.mxu0 0.0
    %655 = vmatprep.subr.mxu0 0.0
    %656 = vmatpush1.msra.mxu0 0.0
    %657 = vmatprep.subr.mxu0 0.0
    %658 = vmatpush1.msra.mxu0 0.0
    %659 = vmatprep.subr.mxu0 0.0
    %660 = vmatpush1.msra.mxu0 0.0
    %661 = vmatprep.subr.mxu0 0.0
    %662 = vmatpush1.msra.mxu0 0.0
    %663 = vmatprep.subr.mxu0 0.0
    %664 = vmatpush1.msra.mxu0 0.0
    %665 = vmatprep.subr.mxu0 0.0
    %666 = vmatpush1.msra.mxu0 0.0
    %667 = vmatprep.subr.mxu0 0.0
    %668 = vmatpush1.msra.mxu0 0.0
    %669 = vmatprep.subr.mxu0 0.0
    %670 = vmatpush1.msra.mxu0 0.0
    %671 = vmatprep.subr.mxu0 0.0
    %672 = vmatpush1.msra.mxu0 %v636
    %673 = vmatprep.subr.mxu0 0.0
    %674 = vmatpush1.msra.mxu0 %v635
    %675 = vmatprep.subr.mxu0 0.0
    %676 = vmatpush1.msra.mxu0 %v634
    %677 = vmatprep.subr.mxu0 0.0
    %678 = vmatpush1.msra.mxu0 %v633
    %679 = vmatprep.subr.mxu0 0.0
    %680 = vmatpush2.msra.mxu0 0.0
    %681 = vmatprep.subr.mxu0 0.0
    %682 = vmatpush2.msra.mxu0 0.0
    %683 = vmatprep.subr.mxu0 0.0
    %684 = vmatpush2.msra.mxu0 0.0
    %685 = vmatprep.subr.mxu0 0.0
    %686 = vmatpush2.msra.mxu0 0.0
    %687 = vmatprep.subr.mxu0 0.0
    %688 = vmatpush2.msra.mxu0 0.0
    %689 = vmatprep.subr.mxu0 0.0
    %690 = vmatpush2.msra.mxu0 0.0
    %691 = vmatprep.subr.mxu0 0.0
    %692 = vmatpush2.msra.mxu0 0.0
    %693 = vmatprep.subr.mxu0 0.0
    %694 = vmatpush2.msra.mxu0 0.0
    %695 = vmatprep.subr.mxu0 0.0
    %696 = vmatpush2.msra.mxu0 0.0
    %697 = vmatprep.subr.mxu0 0.0
    %698 = vmatpush2.msra.mxu0 0.0
    %699 = vmatprep.subr.mxu0 0.0
    %700 = vmatpush2.msra.mxu0 0.0
    %701 = vmatprep.subr.mxu0 0.0
    %702 = vmatpush2.msra.mxu0 0.0
    %703 = vmatprep.subr.mxu0 0.0
    %704 = vmatpush2.msra.mxu0 0.0
    %705 = vmatprep.subr.mxu0 0.0
    %706 = vmatpush2.msra.mxu0 0.0
    %707 = vmatprep.subr.mxu0 0.0
    %708 = vmatpush2.msra.mxu0 0.0
    %709 = vmatprep.subr.mxu0 0.0
    %710 = vmatpush2.msra.mxu0 0.0
    %711 = vmatprep.mubr.f32.mxu0 0.0
    %712 = vmatmul.mubr.f32.gmra.mxu0 %v645
    %v713 = vpop.f32.mrf.mxu0
    %v714 = vadd.f32 %v642, %v713
    %v715 = vpop.f32.mrf.mxu0
    %716 = vdwg.mxu0
    %717 = vst [vmem:[%s12] sm:$0xff] 0.0
    %vm718 = vcmask 64512
    %719 = vst.msk [vmem:[%s12] sm:$0xff] %vm718, %v626
    %720 = vrot.lane.b32.xlu0 %v535, 8
    %v721 = vpop.permute.xlu0 %720
    %vm723 = vcmask 326720
    %724 = vst.msk [vmem:[%s12] sm:$0xff] %vm723, %v721
    %726 = vrot.lane.b32.xlu0 %v714, 40
    %v727 = vpop.permute.xlu0 %726
    %vm729 = vcmask 392512
    %730 = vst.msk [vmem:[%s12] sm:$0xff] %vm729, %v727
    // Predicated region
    $region62: #{rnn_fc_forward.1} parent=1 // pred_check
      _
    $region63: #{rnn_fc_forward.1} parent=1 // pred_check_branch
      %732 = sbr.rel (0) target = $region65
    $region64: #{rnn_fc_forward.1} parent=1 // pred_region
      _
    $region65: #{rnn_fc_forward.1} parent=1 // pred_fallthru
      _
    // Predicated region
    $region66: #{rnn_fc_forward.1} parent=1 // pred_check
      _
    $region67: #{rnn_fc_forward.1} parent=1 // pred_check_branch
      %734 = sbr.rel (0) target = $region69
    $region68: #{rnn_fc_forward.1} parent=1 // pred_region
      _
    $region69: #{rnn_fc_forward.1} parent=1 // pred_fallthru
      _
    %735 = vsyncpa [#allocation3], 1
    %736 = vsyncpa [#allocation5], 1

</llo_original>
